<compile_context>
chip_gen: v7x
topology: tpu7x:2x2x1
jax: 0.10.0
libtpu: 0.0.40
codegen_flags: <defaults>
</compile_context>

<pallas_src>
import jax
import jax.numpy as jnp
from jax.experimental import pallas as pl
from jax.experimental.pallas import tpu as pltpu

LANE = 128
SUBLANE = 8
D_IN, D_H1, D_H2 = 64, 128, 512


def _round_up(n, m):
    return ((n + m - 1) // m) * m


def _cdiv(a, b):
    return (a + b - 1) // b


def decoder_kernel(x_ref, w1_ref, b1_ref, w2_ref, b2_ref, w3_ref, b3_ref,
                   o_ref, h2_ref):
    """Grid = (batch tiles, output-feature tiles); j (axis 1) is innermost."""
    # fc1 + fc2 depend only on the batch tile -> compute once per batch tile
    # (first N step) and keep the bf16 activations resident in VMEM scratch.
    @pl.when(pl.program_id(1) == 0)
    def _():
        xb = x_ref[...].astype(jnp.bfloat16)               # in-kernel cast
        h1 = jnp.dot(xb, w1_ref[...], preferred_element_type=jnp.float32)
        h1 = jnp.maximum(h1 + b1_ref[...], 0.0).astype(jnp.bfloat16)
        h2 = jnp.dot(h1, w2_ref[...], preferred_element_type=jnp.float32)
        h2_ref[...] = jnp.maximum(h2 + b2_ref[...], 0.0).astype(jnp.bfloat16)

    # fc3 for this output tile (no activation).
    h3 = jnp.dot(h2_ref[...], w3_ref[...], preferred_element_type=jnp.float32)
    o_ref[...] = (h3 + b3_ref[...]).astype(o_ref.dtype)


def _vmem_budget():
    """(explicit-buffer budget, scoped vmem limit) for the local TPU generation."""
    try:
        phys = int(pltpu.get_tpu_info().vmem_capacity_bytes)
    except Exception:
        phys = 64 << 20  # conservative fallback (v7x: 64 MiB per TensorCore)
    limit = int(min(phys // 2, 64 << 20))   # 32 MiB on v7x, 64 MiB on v5e/v6e
    budget = limit // 2                     # leave half for compiler temporaries
    return budget, limit


def prepare_decoder_params(params, *, block_n=1024):
    """One-time conversion of f32 masters to the kernel layout (hoisted out of
    the per-call path): bf16 (in, out) weights, f32 (1, out) biases, fc3
    padded so the output feature dim is an exact multiple of the N tile."""
    out_size = params["w3"].shape[1]
    out_128 = _round_up(out_size, LANE)
    num_n = _cdiv(out_128, block_n)
    tn = _round_up(_cdiv(out_128, num_n), LANE)   # near-equal, 128-aligned N tiles
    out_pad = tn * num_n

    w3 = params["w3"].astype(jnp.bfloat16)
    b3 = params["b3"].reshape(1, -1).astype(jnp.float32)
    if out_pad != out_size:
        w3 = jnp.pad(w3, ((0, 0), (0, out_pad - out_size)))
        b3 = jnp.pad(b3, ((0, 0), (0, out_pad - out_size)))

    return {
        "w1": params["w1"].astype(jnp.bfloat16),
        "b1": params["b1"].reshape(1, -1).astype(jnp.float32),
        "w2": params["w2"].astype(jnp.bfloat16),
        "b2": params["b2"].reshape(1, -1).astype(jnp.float32),
        "w3": w3,
        "b3": b3,
        "out_size": out_size,
        "tn": tn,
    }


def decoder_forward(x, prepared, *, max_block_b=2048, out_dtype=jnp.float32):
    """x: (B, 64) float32. prepared: output of prepare_decoder_params.
    Returns (B, output_size) in out_dtype (float32 by default, matching PyTorch)."""
    B, in_dim = x.shape
    assert in_dim == D_IN, in_dim
    out_size, tn = prepared["out_size"], prepared["tn"]
    w1, b1 = prepared["w1"], prepared["b1"]
    w2, b2 = prepared["w2"], prepared["b2"]
    w3, b3 = prepared["w3"], prepared["b3"]
    out_pad = w3.shape[1]
    num_n = out_pad // tn
    out_itemsize = jnp.dtype(out_dtype).itemsize

    # --- VMEM-aware batch-tile sizing ------------------------------------
    budget, vmem_limit = _vmem_budget()
    # Bytes that don't scale with tb (weights/biases, double-buffered specs).
    fixed = 2 * (w1.size * 2 + w2.size * 2 + D_H2 * tn * 2
                 + b1.size * 4 + b2.size * 4 + tn * 4)
    # Per-batch-row bytes: x tile (2 bufs f32) + out tile (2 bufs) + h2 scratch
    # (bf16) + in-kernel f32 temporaries (h1, h2, h3).
    per_row = (2 * D_IN * 4 + 2 * tn * out_itemsize + D_H2 * 2
               + (D_H1 + D_H2 + tn) * 4)
    align = LANE if B >= LANE else SUBLANE
    tb_cap = max((budget - fixed) // per_row, align)
    tb_cap = min(tb_cap, max_block_b)
    tb_cap = max(align, (tb_cap // align) * align)

    # Near-equal tiles so e.g. B=257 pads to 2x136 rows, not 2x256.
    num_b = _cdiv(B, tb_cap)
    tb = _round_up(_cdiv(B, num_b), align)
    b_pad = tb * num_b
    if b_pad != B:
        x = jnp.pad(x, ((0, b_pad - B), (0, 0)))

    grid = (num_b, num_n)

    flops = 2 * b_pad * (D_IN * D_H1 + D_H1 * D_H2 + D_H2 * out_pad)
    bytes_accessed = (b_pad * D_IN * 4 + b_pad * out_pad * out_itemsize
                      + (w1.size + w2.size + w3.size) * 2
                      + (b1.size + b2.size + b3.size) * 4)

    out_padded = pl.pallas_call(
        decoder_kernel,
        out_shape=jax.ShapeDtypeStruct((b_pad, out_pad), out_dtype),
        grid_spec=pltpu.PrefetchScalarGridSpec(
            num_scalar_prefetch=0,
            grid=grid,
            in_specs=[
                pl.BlockSpec((tb, D_IN), lambda i, j: (i, 0)),   # x batch tile
                pl.BlockSpec(w1.shape, lambda i, j: (0, 0)),     # VMEM-resident
                pl.BlockSpec(b1.shape, lambda i, j: (0, 0)),
                pl.BlockSpec(w2.shape, lambda i, j: (0, 0)),
                pl.BlockSpec(b2.shape, lambda i, j: (0, 0)),
                pl.BlockSpec((D_H2, tn), lambda i, j: (0, j)),   # fc3 N tile
                pl.BlockSpec((1, tn), lambda i, j: (0, j)),
            ],
            out_specs=pl.BlockSpec((tb, tn), lambda i, j: (i, j)),
            scratch_shapes=[pltpu.VMEM((tb, D_H2), jnp.bfloat16)],  # resident h2
        ),
        compiler_params=pltpu.CompilerParams(
            # Batch axis parallel (shards across v7x's 2 TCs; no-op on v5e/v6e);
            # N axis arbitrary because of the h2-scratch carry across j.
            dimension_semantics=("parallel", "arbitrary"),
            vmem_limit_bytes=vmem_limit,
        ),
        cost_estimate=pl.CostEstimate(
            flops=int(flops), transcendentals=0,
            bytes_accessed=int(bytes_accessed)),
    )(x, w1, b1, w2, b2, w3, b3)

    return out_padded[:B, :out_size]


def init_params(key, output_size):
    """Deterministic init matching the PyTorch module's shapes.

    PyTorch stores Linear weight as (out, in); we store the transpose (in, out)
    so the kernel does x @ W directly.  Masters kept in f32."""
    ks = jax.random.split(key, 6)

    def linear(kw, kb, fan_in, fan_out):
        bound = 1.0 / jnp.sqrt(fan_in)
        w = jax.random.uniform(kw, (fan_in, fan_out), jnp.float32, -bound, bound)
        b = jax.random.uniform(kb, (1, fan_out), jnp.float32, -bound, bound)
        return w, b

    w1, b1 = linear(ks[0], ks[1], D_IN, D_H1)
    w2, b2 = linear(ks[2], ks[3], D_H1, D_H2)
    w3, b3 = linear(ks[4], ks[5], D_H2, output_size)
    return {"w1": w1, "b1": b1, "w2": w2, "b2": b2, "w3": w3, "b3": b3}


def decoder_ref(x, p):
    """Pure-JAX reference mirroring the kernel's bf16-operand / f32-accumulate math."""
    xb = x.astype(jnp.bfloat16)
    w1 = p["w1"].astype(jnp.bfloat16)
    w2 = p["w2"].astype(jnp.bfloat16)
    w3 = p["w3"].astype(jnp.bfloat16)
    h = jnp.dot(xb, w1, preferred_element_type=jnp.float32) + p["b1"]
    h = jnp.maximum(h, 0.0).astype(jnp.bfloat16)
    h = jnp.dot(h, w2, preferred_element_type=jnp.float32) + p["b2"]
    h = jnp.maximum(h, 0.0).astype(jnp.bfloat16)
    return jnp.dot(h, w3, preferred_element_type=jnp.float32) + p["b3"]


def decoder_ref_f32(x, p):
    """Full-precision reference mirroring the PyTorch forward exactly."""
    h = jnp.maximum(x @ p["w1"] + p["b1"], 0.0)
    h = jnp.maximum(h @ p["w2"] + p["b2"], 0.0)
    return h @ p["w3"] + p["b3"]


def _check(x, params, prepared):
    out = jax.block_until_ready(decoder_forward(x, prepared))
    B = x.shape[0]
    out_size = params["w3"].shape[1]
    assert out.shape == (B, out_size), out.shape
    # Tight check vs a reference that mirrors the kernel's bf16/f32 math.
    ref_bf16 = decoder_ref(x, params)
    assert jnp.allclose(out, ref_bf16, atol=1e-2, rtol=1e-2), "mismatch vs bf16 ref"
    # Loose check vs the full-f32 PyTorch-equivalent forward (bf16 rounding only).
    ref_f32 = decoder_ref_f32(x, params)
    assert jnp.allclose(out, ref_f32, atol=5e-2, rtol=5e-2), "mismatch vs f32 ref"


if __name__ == "__main__":
    key = jax.random.PRNGKey(0)
    k_x, k_p, k_x2, k_p2 = jax.random.split(key, 4)

    # Small canonical case.
    output_size, batch = 256, 8
    x = jax.random.normal(k_x, (batch, D_IN), jnp.float32)
    params = init_params(k_p, output_size)
    prepared = prepare_decoder_params(params)
    _check(x, params, prepared)

    # Awkward shapes: batch not a tile multiple, output_size not lane-aligned.
    output_size2, batch2 = 200, 300
    x2 = jax.random.normal(k_x2, (batch2, D_IN), jnp.float32)
    params2 = init_params(k_p2, output_size2)
    prepared2 = prepare_decoder_params(params2)
    _check(x2, params2, prepared2)

    print("KERNEL_OK")
</pallas_src>

<mosaic_0001>
module attributes {stable_mosaic.version = 11 : i64} {
  func.func @decoder_kernel(%arg0: i32, %arg1: i32, %arg2: memref<8x64xf32, #tpu.memory_space<vmem>>, %arg3: memref<64x128xbf16, #tpu.memory_space<vmem>>, %arg4: memref<1x128xf32, #tpu.memory_space<vmem>>, %arg5: memref<128x512xbf16, #tpu.memory_space<vmem>>, %arg6: memref<1x512xf32, #tpu.memory_space<vmem>>, %arg7: memref<512x256xbf16, #tpu.memory_space<vmem>>, %arg8: memref<1x256xf32, #tpu.memory_space<vmem>>, %arg9: memref<8x256xf32, #tpu.memory_space<vmem>>, %arg10: memref<8x512xbf16, #tpu.memory_space<vmem>>) attributes {dimension_semantics = [#tpu.dimension_semantics<parallel>, #tpu.dimension_semantics<arbitrary>], iteration_bounds = array<i64: 1, 1>, scalar_prefetch = 0 : i64, scratch_operands = 1 : i64, tpu.core_type = #tpu.core_type<tc>, window_params = [{transform_indices = @transform_0, window_bounds = array<i64: 8, 64>}, {pipeline_mode = #tpu.pipeline_mode<synchronous>, transform_indices = @transform_1, window_bounds = array<i64: 64, 128>}, {pipeline_mode = #tpu.pipeline_mode<synchronous>, transform_indices = @transform_2, window_bounds = array<i64: 1, 128>}, {pipeline_mode = #tpu.pipeline_mode<synchronous>, transform_indices = @transform_3, window_bounds = array<i64: 128, 512>}, {pipeline_mode = #tpu.pipeline_mode<synchronous>, transform_indices = @transform_4, window_bounds = array<i64: 1, 512>}, {transform_indices = @transform_5, window_bounds = array<i64: 512, 256>}, {transform_indices = @transform_6, window_bounds = array<i64: 1, 256>}, {transform_indices = @transform_7, window_bounds = array<i64: 8, 256>}]} {
    %c0_i32 = arith.constant 0 : i32
    %0 = arith.cmpi eq, %arg1, %c0_i32 : i32
    %1 = arith.extui %0 : i1 to i32
    %c0_i32_0 = arith.constant 0 : i32
    %2 = arith.cmpi ne, %1, %c0_i32_0 : i32
    scf.if %2 {
      %c0_8 = arith.constant 0 : index
      %c0_9 = arith.constant 0 : index
      %10 = vector.load %arg2[%c0_8, %c0_9] : memref<8x64xf32, #tpu.memory_space<vmem>>, vector<8x64xf32>
      %11 = arith.truncf %10 : vector<8x64xf32> to vector<8x64xbf16>
      %c0_10 = arith.constant 0 : index
      %c0_11 = arith.constant 0 : index
      %12 = vector.load %arg3[%c0_10, %c0_11] : memref<64x128xbf16, #tpu.memory_space<vmem>>, vector<64x128xbf16>
      %cst_12 = arith.constant dense<0.000000e+00> : vector<8x128xf32>
      %13 = tpu.matmul %11, %12, %cst_12 {dimension_numbers = #tpu.dot_dimension_numbers<[1], [0], [0], [1], [0, 0, 1, 1], [], []>} : vector<8x64xbf16>, vector<64x128xbf16>, vector<8x128xf32> -> vector<8x128xf32>
      %c0_13 = arith.constant 0 : index
      %c0_14 = arith.constant 0 : index
      %14 = vector.load %arg4[%c0_13, %c0_14] : memref<1x128xf32, #tpu.memory_space<vmem>>, vector<1x128xf32>
      %15 = vector.broadcast %14 : vector<1x128xf32> to vector<8x128xf32>
      %16 = arith.addf %13, %15 : vector<8x128xf32>
      %cst_15 = arith.constant 0.000000e+00 : f32
      %17 = vector.broadcast %cst_15 : f32 to vector<8x128xf32>
      %18 = arith.maximumf %16, %17 : vector<8x128xf32>
      %19 = arith.truncf %18 : vector<8x128xf32> to vector<8x128xbf16>
      %c0_16 = arith.constant 0 : index
      %c0_17 = arith.constant 0 : index
      %20 = vector.load %arg5[%c0_16, %c0_17] : memref<128x512xbf16, #tpu.memory_space<vmem>>, vector<128x512xbf16>
      %cst_18 = arith.constant dense<0.000000e+00> : vector<8x512xf32>
      %21 = tpu.matmul %19, %20, %cst_18 {dimension_numbers = #tpu.dot_dimension_numbers<[1], [0], [0], [1], [0, 0, 1, 1], [], []>} : vector<8x128xbf16>, vector<128x512xbf16>, vector<8x512xf32> -> vector<8x512xf32>
      %c0_19 = arith.constant 0 : index
      %c0_20 = arith.constant 0 : index
      %22 = vector.load %arg6[%c0_19, %c0_20] : memref<1x512xf32, #tpu.memory_space<vmem>>, vector<1x512xf32>
      %23 = vector.broadcast %22 : vector<1x512xf32> to vector<8x512xf32>
      %24 = arith.addf %21, %23 : vector<8x512xf32>
      %cst_21 = arith.constant 0.000000e+00 : f32
      %25 = vector.broadcast %cst_21 : f32 to vector<8x512xf32>
      %26 = arith.maximumf %24, %25 : vector<8x512xf32>
      %27 = arith.truncf %26 : vector<8x512xf32> to vector<8x512xbf16>
      %c0_22 = arith.constant 0 : index
      %c0_23 = arith.constant 0 : index
      %28 = vector.load %arg10[%c0_22, %c0_23] : memref<8x512xbf16, #tpu.memory_space<vmem>>, vector<8x512xbf16>
      tpu.vector_store %arg10[%c0_22, %c0_23], %27 {strides = array<i32>} : memref<8x512xbf16, #tpu.memory_space<vmem>>, vector<8x512xbf16>,
    } else {
    }
    %c0 = arith.constant 0 : index
    %c0_1 = arith.constant 0 : index
    %3 = vector.load %arg10[%c0, %c0_1] : memref<8x512xbf16, #tpu.memory_space<vmem>>, vector<8x512xbf16>
    %c0_2 = arith.constant 0 : index
    %c0_3 = arith.constant 0 : index
    %4 = vector.load %arg7[%c0_2, %c0_3] : memref<512x256xbf16, #tpu.memory_space<vmem>>, vector<512x256xbf16>
    %cst = arith.constant dense<0.000000e+00> : vector<8x256xf32>
    %5 = tpu.matmul %3, %4, %cst {dimension_numbers = #tpu.dot_dimension_numbers<[1], [0], [0], [1], [0, 0, 1, 1], [], []>} : vector<8x512xbf16>, vector<512x256xbf16>, vector<8x256xf32> -> vector<8x256xf32>
    %c0_4 = arith.constant 0 : index
    %c0_5 = arith.constant 0 : index
    %6 = vector.load %arg8[%c0_4, %c0_5] : memref<1x256xf32, #tpu.memory_space<vmem>>, vector<1x256xf32>
    %7 = vector.broadcast %6 : vector<1x256xf32> to vector<8x256xf32>
    %8 = arith.addf %5, %7 : vector<8x256xf32>
    %c0_6 = arith.constant 0 : index
    %c0_7 = arith.constant 0 : index
    %9 = vector.load %arg9[%c0_6, %c0_7] : memref<8x256xf32, #tpu.memory_space<vmem>>, vector<8x256xf32>
    tpu.vector_store %arg9[%c0_6, %c0_7], %8 {strides = array<i32>} : memref<8x256xf32, #tpu.memory_space<vmem>>, vector<8x256xf32>,
    return
  }
  func.func @transform_0(%arg0: i32, %arg1: i32) -> (i32, i32) {
    %c0_i32 = arith.constant 0 : i32
    %c0_i32_0 = arith.constant 0 : i32
    return %arg0, %c0_i32 : i32, i32
  }
  func.func @transform_1(%arg0: i32, %arg1: i32) -> (i32, i32) {
    %c0_i32 = arith.constant 0 : i32
    %c0_i32_0 = arith.constant 0 : i32
    %c0_i32_1 = arith.constant 0 : i32
    return %c0_i32, %c0_i32_0 : i32, i32
  }
  func.func @transform_2(%arg0: i32, %arg1: i32) -> (i32, i32) {
    %c0_i32 = arith.constant 0 : i32
    %c0_i32_0 = arith.constant 0 : i32
    %c0_i32_1 = arith.constant 0 : i32
    return %c0_i32, %c0_i32_0 : i32, i32
  }
  func.func @transform_3(%arg0: i32, %arg1: i32) -> (i32, i32) {
    %c0_i32 = arith.constant 0 : i32
    %c0_i32_0 = arith.constant 0 : i32
    %c0_i32_1 = arith.constant 0 : i32
    return %c0_i32, %c0_i32_0 : i32, i32
  }
  func.func @transform_4(%arg0: i32, %arg1: i32) -> (i32, i32) {
    %c0_i32 = arith.constant 0 : i32
    %c0_i32_0 = arith.constant 0 : i32
    %c0_i32_1 = arith.constant 0 : i32
    return %c0_i32, %c0_i32_0 : i32, i32
  }
  func.func @transform_5(%arg0: i32, %arg1: i32) -> (i32, i32) {
    %c0_i32 = arith.constant 0 : i32
    %c0_i32_0 = arith.constant 0 : i32
    return %c0_i32, %arg1 : i32, i32
  }
  func.func @transform_6(%arg0: i32, %arg1: i32) -> (i32, i32) {
    %c0_i32 = arith.constant 0 : i32
    %c0_i32_0 = arith.constant 0 : i32
    return %c0_i32, %arg1 : i32, i32
  }
  func.func @transform_7(%arg0: i32, %arg1: i32) -> (i32, i32) {
    %c0_i32 = arith.constant 0 : i32
    return %arg0, %arg1 : i32, i32
  }
}

</mosaic_0001>

<llo_original>
// kernel: tpu_custom_call.1
$region0: #{tpu_custom_call.1}
  #allocation0 [shape = 'u32[]', space=smem, size = 0x4, offset = 0x4, fixed_abs, tag = 'smem constant byte address 0x4 - core index']
  #allocation1 [shape = 'u32[144,128]{1,0:T(1,128)}', space=vmem, size = 0x12000, scoped, tag = 'internal scratch']
  #allocation2 [shape = 'bf16[8,512]{1,0:T(8,128)(2,1)}', space=vmem, size = 0x2000, scoped, tag = 'scratch operand']
  %s0 = inlined_call_operand.hbm [shape: f32[8,64], index: 0, kind: input, shape index: {}]
  %s1 = inlined_call_operand.hbm [shape: bf16[64,128], index: 1, kind: input, shape index: {}]
  %s2 = inlined_call_operand.vmem [shape: f32[1,128], index: 2, kind: input, shape index: {}]
  %s3 = inlined_call_operand.hbm [shape: bf16[128,512], index: 3, kind: input, shape index: {}]
  %s4 = inlined_call_operand.vmem [shape: f32[1,512], index: 4, kind: input, shape index: {}]
  %s5 = inlined_call_operand.hbm [shape: bf16[512,256], index: 5, kind: input, shape index: {}]
  %s6 = inlined_call_operand.vmem [shape: f32[1,256], index: 6, kind: input, shape index: {}]
  %s7 = inlined_call_operand.hbm [shape: f32[8,256], index: 7, kind: output, shape index: {}]
  %s8 = sld [smem:[#allocation0]]
  $region58: #{tpu_custom_call.1} parent=0
    _
  %s10 = ssub.s32 1, %s8
  %s11 = scalar_select 0, %s10, %s8
  $region1: #{tpu_custom_call.1} parent=0
    #allocation3 [shape = 'u8[4096]{0}', space=vmem, size = 0x1000, scoped, tag = 'input window, operand 0, single buffered']
    #allocation4 [shape = 's32[1]{0}', space=sflag, size = 0x4, scoped, tag = 'scoped memory for tpu_custom_call.1']
    #allocation5 [shape = 's32[1]{0}', space=sflag, size = 0x4, scoped, tag = 'scoped memory for tpu_custom_call.1']
    #allocation6 [shape = 'u8[16384]{0}', space=vmem, size = 0x4000, scoped, tag = 'input window, operand 1, single buffered']
    #allocation7 [shape = 's32[1]{0}', space=sflag, size = 0x4, scoped, tag = 'scoped memory for tpu_custom_call.1']
    #allocation8 [shape = 'u8[131072]{0}', space=vmem, size = 0x20000, scoped, tag = 'input window, operand 3, single buffered']
    #allocation9 [shape = 'u8[262144]{0}', space=vmem, size = 0x40000, scoped, tag = 'input window, operand 5, single buffered']
    #allocation10 [shape = 's32[1]{0}', space=sflag, size = 0x4, scoped, tag = 'scoped memory for tpu_custom_call.1']
    #allocation11 [shape = 'u8[8192]{0}', space=vmem, size = 0x2000, scoped, tag = 'output window, operand 0, single buffered']
    %12 = vsyncpa [#allocation4], 0
    %13 = vsyncpa [#allocation7], 0
    %14 = vsyncpa [#allocation10], 0
    %15 = vsyncpa [#allocation5], 0
    // Predicated region
    $region2: #{tpu_custom_call.1} parent=1 // pred_check
      _
    $region3: #{tpu_custom_call.1} parent=1 // pred_check_branch
      %17 = sbr.rel (0) target = $region5
    $region4: #{tpu_custom_call.1} parent=1 // pred_region
      %s19 = ssub.s32 128, 128
      %20 = vsyncadd [#allocation4], %s19
      %s22 = sshll.u32 [#allocation3], 4
      %s23 = int_to_ptr.vmem [resolvable:$true] %s22
      %25 = dma.hbm_to_vmem [thread:$0]  %s0, 128, %s23, [#allocation4]
    $region5: #{tpu_custom_call.1} parent=1 // pred_fallthru
      _
    // Predicated region
    $region6: #{tpu_custom_call.1} parent=1 // pred_check
      _
    $region7: #{tpu_custom_call.1} parent=1 // pred_check_branch
      %27 = sbr.rel (0) target = $region9
    $region8: #{tpu_custom_call.1} parent=1 // pred_region
      %s29 = ssub.s32 512, 512
      %30 = vsyncadd [#allocation7], %s29
      %s31 = sshll.u32 [#allocation6], 4
      %s32 = int_to_ptr.vmem [resolvable:$true] %s31
      %37 = dma.hbm_to_vmem [thread:$0]  %s1, 512, %s32, [#allocation7], 64, 64, 4
    $region9: #{tpu_custom_call.1} parent=1 // pred_fallthru
      _
    // Predicated region
    $region10: #{tpu_custom_call.1} parent=1 // pred_check
      _
    $region11: #{tpu_custom_call.1} parent=1 // pred_check_branch
      %39 = sbr.rel (0) target = $region13
    $region12: #{tpu_custom_call.1} parent=1 // pred_region
      _
    $region13: #{tpu_custom_call.1} parent=1 // pred_fallthru
      _
    // Predicated region
    $region14: #{tpu_custom_call.1} parent=1 // pred_check
      _
    $region15: #{tpu_custom_call.1} parent=1 // pred_check_branch
      %41 = sbr.rel (0) target = $region17
    $region16: #{tpu_custom_call.1} parent=1 // pred_region
      %s43 = ssub.s32 4096, 4096
      %44 = vsyncadd [#allocation7], %s43
      %s45 = sshll.u32 [#allocation8], 4
      %s46 = int_to_ptr.vmem [resolvable:$true] %s45
      %51 = dma.hbm_to_vmem [thread:$0]  %s3, 4096, %s46, [#allocation7], 256, 256, 16
    $region17: #{tpu_custom_call.1} parent=1 // pred_fallthru
      _
    // Predicated region
    $region18: #{tpu_custom_call.1} parent=1 // pred_check
      _
    $region19: #{tpu_custom_call.1} parent=1 // pred_check_branch
      %53 = sbr.rel (0) target = $region21
    $region20: #{tpu_custom_call.1} parent=1 // pred_region
      _
    $region21: #{tpu_custom_call.1} parent=1 // pred_fallthru
      _
    // Predicated region
    $region22: #{tpu_custom_call.1} parent=1 // pred_check
      _
    $region23: #{tpu_custom_call.1} parent=1 // pred_check_branch
      %55 = sbr.rel (0) target = $region25
    $region24: #{tpu_custom_call.1} parent=1 // pred_region
      %s57 = ssub.s32 8192, 8192
      %58 = vsyncadd [#allocation10], %s57
      %s59 = sshll.u32 [#allocation9], 4
      %s60 = int_to_ptr.vmem [resolvable:$true] %s59
      %65 = dma.hbm_to_vmem [thread:$0]  %s5, 8192, %s60, [#allocation10], 128, 128, 8
    $region25: #{tpu_custom_call.1} parent=1 // pred_fallthru
      _
    // Predicated region
    $region26: #{tpu_custom_call.1} parent=1 // pred_check
      _
    $region27: #{tpu_custom_call.1} parent=1 // pred_check_branch
      %67 = sbr.rel (0) target = $region29
    $region28: #{tpu_custom_call.1} parent=1 // pred_region
      _
    $region29: #{tpu_custom_call.1} parent=1 // pred_fallthru
      _
    // Predicated region
    $region30: #{tpu_custom_call.1} parent=1 // pred_check
      _
    $region31: #{tpu_custom_call.1} parent=1 // pred_check_branch
      %69 = sbr.rel (0) target = $region33
    $region32: #{tpu_custom_call.1} parent=1 // pred_region
      %70 = dma.done [#allocation4], 128
    $region33: #{tpu_custom_call.1} parent=1 // pred_fallthru
      _
    // Predicated region
    $region34: #{tpu_custom_call.1} parent=1 // pred_check
      _
    $region35: #{tpu_custom_call.1} parent=1 // pred_check_branch
      %72 = sbr.rel (0) target = $region37
    $region36: #{tpu_custom_call.1} parent=1 // pred_region
      %73 = dma.done [#allocation7], 512
    $region37: #{tpu_custom_call.1} parent=1 // pred_fallthru
      _
    // Predicated region
    $region38: #{tpu_custom_call.1} parent=1 // pred_check
      _
    $region39: #{tpu_custom_call.1} parent=1 // pred_check_branch
      %75 = sbr.rel (0) target = $region41
    $region40: #{tpu_custom_call.1} parent=1 // pred_region
      %76 = dma.done [#allocation7], 4096
    $region41: #{tpu_custom_call.1} parent=1 // pred_fallthru
      _
    // Predicated region
    $region42: #{tpu_custom_call.1} parent=1 // pred_check
      _
    $region43: #{tpu_custom_call.1} parent=1 // pred_check_branch
      %78 = sbr.rel (0) target = $region45
    $region44: #{tpu_custom_call.1} parent=1 // pred_region
      %79 = dma.done [#allocation10], 8192
    $region45: #{tpu_custom_call.1} parent=1 // pred_fallthru
      _
    %p81 = scmp.eq.s32.totalorder 0, 0
    // Predicated region
    $region46: #{tpu_custom_call.1} parent=1 // pred_check
      %p82 = pneg %p81
    $region47: #{tpu_custom_call.1} parent=1 // pred_check_branch
      %84 = sbr.rel (%p82) target = $region49
    $region48: #{tpu_custom_call.1} parent=1 // pred_region
      %v85 = vld [vmem:[#allocation3] sm:$0xff]
      %v86 = vpack.c.bf16 %v85, %v85
      %v87 = vld [vmem:[#allocation6] sm:$0xf]
      %v88 = vld [vmem:[#allocation6 + $0x4] sm:$0xf]
      %v89 = vld [vmem:[#allocation6 + $0x8] sm:$0xf]
      %v90 = vld [vmem:[#allocation6 + $0xc] sm:$0xf]
      %v91 = vld [vmem:[#allocation6 + $0x10] sm:$0xf]
      %v92 = vld [vmem:[#allocation6 + $0x14] sm:$0xf]
      %v93 = vld [vmem:[#allocation6 + $0x18] sm:$0xf]
      %v94 = vld [vmem:[#allocation6 + $0x1c] sm:$0xf]
      %v95 = vld [vmem:[%s2] sm:$0x1]
      %v97 = vlaneseq
      %v98 = vshrl.u32 %v97, 7
      %v99 = vsub.s32 0, %v98
      %v100 = vrot.slane %v95, %v99
      %v110 = vunpack.c.l.b16 %v87
      %v111 = vunpack.c.l.b16 %v88
      %v112 = vunpack.c.l.b16 %v89
      %v113 = vunpack.c.l.b16 %v90
      %v114 = vunpack.c.l.b16 %v91
      %v115 = vunpack.c.l.b16 %v92
      %v116 = vunpack.c.l.b16 %v93
      %v117 = vunpack.c.l.b16 %v94
      %v118 = vpack.c.b16 %v111, %v110
      %v119 = vpack.c.b16 %v113, %v112
      %v120 = vpack.c.b16 %v115, %v114
      %v121 = vpack.c.b16 %v117, %v116
      %vm126 = vcmask 523264
      %v128 = vsel %vm126, %v86, 0
      %130 = vmatprep.subr.bf16.mxu0 0
      %131 = vmatpush1.bf16.msra.mxu0 %v118
      %132 = vmatprep.subr.bf16.mxu0 0
      %133 = vmatpush1.bf16.msra.mxu0 %v119
      %134 = vmatprep.subr.bf16.mxu0 0
      %135 = vmatpush1.bf16.msra.mxu0 %v120
      %136 = vmatprep.subr.bf16.mxu0 0
      %137 = vmatpush1.bf16.msra.mxu0 %v121
      %138 = vmatprep.subr.bf16.mxu0 0
      %139 = vmatpush1.bf16.msra.mxu0 0
      %140 = vmatprep.subr.bf16.mxu0 0
      %141 = vmatpush1.bf16.msra.mxu0 0
      %142 = vmatprep.subr.bf16.mxu0 0
      %143 = vmatpush1.bf16.msra.mxu0 0
      %144 = vmatprep.subr.bf16.mxu0 0
      %145 = vmatpush1.bf16.msra.mxu0 0
      %146 = vmatprep.subr.bf16.mxu0 0
      %147 = vmatpush1.bf16.msra.mxu0 0
      %148 = vmatprep.subr.bf16.mxu0 0
      %149 = vmatpush1.bf16.msra.mxu0 0
      %150 = vmatprep.subr.bf16.mxu0 0
      %151 = vmatpush1.bf16.msra.mxu0 0
      %152 = vmatprep.subr.bf16.mxu0 0
      %153 = vmatpush1.bf16.msra.mxu0 0
      %154 = vmatprep.subr.bf16.mxu0 0
      %155 = vmatpush1.bf16.msra.mxu0 0
      %156 = vmatprep.subr.bf16.mxu0 0
      %157 = vmatpush1.bf16.msra.mxu0 0
      %158 = vmatprep.subr.bf16.mxu0 0
      %159 = vmatpush1.bf16.msra.mxu0 0
      %160 = vmatprep.subr.bf16.mxu0 0
      %161 = vmatpush1.bf16.msra.mxu0 0
      %162 = vmatprep.mubr.bf16.mxu0 0
      %163 = vmatmul.mubr.bf16.gmra.mrb[0].mxu0 %v128
      %v164 = vpop.f32.mrb[0].mxu0
      %v165 = vadd.f32 %v100, %v164
      %v166 = vpop.f32.mrb[0].mxu0
      %v167 = vpop.f32.mrb[0].mxu0
      %v168 = vpop.f32.mrb[0].mxu0
      %169 = vdwg.mxu0
      %v170 = vmax.f32 %v165, 0.0
      %v171 = vpack.c.bf16 %v170, %v170
      %v172 = vld [vmem:[#allocation8] sm:$0xff]
      %v173 = vld [vmem:[#allocation8 + $0x8] sm:$0xff]
      %v174 = vld [vmem:[#allocation8 + $0x10] sm:$0xff]
      %v175 = vld [vmem:[#allocation8 + $0x18] sm:$0xff]
      %v176 = vld [vmem:[#allocation8 + $0x20] sm:$0xff]
      %v177 = vld [vmem:[#allocation8 + $0x28] sm:$0xff]
      %v178 = vld [vmem:[#allocation8 + $0x30] sm:$0xff]
      %v179 = vld [vmem:[#allocation8 + $0x38] sm:$0xff]
      %v180 = vld [vmem:[#allocation8 + $0x40] sm:$0xff]
      %v181 = vld [vmem:[#allocation8 + $0x48] sm:$0xff]
      %v182 = vld [vmem:[#allocation8 + $0x50] sm:$0xff]
      %v183 = vld [vmem:[#allocation8 + $0x58] sm:$0xff]
      %v184 = vld [vmem:[#allocation8 + $0x60] sm:$0xff]
      %v185 = vld [vmem:[#allocation8 + $0x68] sm:$0xff]
      %v186 = vld [vmem:[#allocation8 + $0x70] sm:$0xff]
      %v187 = vld [vmem:[#allocation8 + $0x78] sm:$0xff]
      %v188 = vld [vmem:[#allocation8 + $0x80] sm:$0xff]
      %v189 = vld [vmem:[#allocation8 + $0x88] sm:$0xff]
      %v190 = vld [vmem:[#allocation8 + $0x90] sm:$0xff]
      %v191 = vld [vmem:[#allocation8 + $0x98] sm:$0xff]
      %v192 = vld [vmem:[#allocation8 + $0xa0] sm:$0xff]
      %v193 = vld [vmem:[#allocation8 + $0xa8] sm:$0xff]
      %v194 = vld [vmem:[#allocation8 + $0xb0] sm:$0xff]
      %v195 = vld [vmem:[#allocation8 + $0xb8] sm:$0xff]
      %v196 = vld [vmem:[#allocation8 + $0xc0] sm:$0xff]
      %v197 = vld [vmem:[#allocation8 + $0xc8] sm:$0xff]
      %v198 = vld [vmem:[#allocation8 + $0xd0] sm:$0xff]
      %v199 = vld [vmem:[#allocation8 + $0xd8] sm:$0xff]
      %v200 = vld [vmem:[#allocation8 + $0xe0] sm:$0xff]
      %v201 = vld [vmem:[#allocation8 + $0xe8] sm:$0xff]
      %v202 = vld [vmem:[#allocation8 + $0xf0] sm:$0xff]
      %v203 = vld [vmem:[#allocation8 + $0xf8] sm:$0xff]
      %v204 = vld [vmem:[%s4] sm:$0xf]
      %v206 = vlaneseq
      %v207 = vshrl.u32 %v206, 7
      %v208 = vsub.s32 0, %v207
      %v209 = vrot.slane %v204, %v208
      %v210 = vlaneseq
      %v211 = vshrl.u32 %v210, 7
      %v212 = vsub.s32 1, %v211
      %v213 = vrot.slane %v204, %v212
      %v214 = vlaneseq
      %v215 = vshrl.u32 %v214, 7
      %v216 = vsub.s32 2, %v215
      %v217 = vrot.slane %v204, %v216
      %v218 = vlaneseq
      %v219 = vshrl.u32 %v218, 7
      %v220 = vsub.s32 3, %v219
      %v221 = vrot.slane %v204, %v220
      %v258 = vunpack.c.l.b16 %v172
      %v259 = vunpack.c.h.b16 %v172
      %v260 = vunpack.c.l.b16 %v173
      %v261 = vunpack.c.h.b16 %v173
      %v262 = vunpack.c.l.b16 %v174
      %v263 = vunpack.c.h.b16 %v174
      %v264 = vunpack.c.l.b16 %v175
      %v265 = vunpack.c.h.b16 %v175
      %v266 = vunpack.c.l.b16 %v176
      %v267 = vunpack.c.h.b16 %v176
      %v268 = vunpack.c.l.b16 %v177
      %v269 = vunpack.c.h.b16 %v177
      %v270 = vunpack.c.l.b16 %v178
      %v271 = vunpack.c.h.b16 %v178
      %v272 = vunpack.c.l.b16 %v179
      %v273 = vunpack.c.h.b16 %v179
      %v274 = vunpack.c.l.b16 %v180
      %v275 = vunpack.c.h.b16 %v180
      %v276 = vunpack.c.l.b16 %v181
      %v277 = vunpack.c.h.b16 %v181
      %v278 = vunpack.c.l.b16 %v182
      %v279 = vunpack.c.h.b16 %v182
      %v280 = vunpack.c.l.b16 %v183
      %v281 = vunpack.c.h.b16 %v183
      %v282 = vunpack.c.l.b16 %v184
      %v283 = vunpack.c.h.b16 %v184
      %v284 = vunpack.c.l.b16 %v185
      %v285 = vunpack.c.h.b16 %v185
      %v286 = vunpack.c.l.b16 %v186
      %v287 = vunpack.c.h.b16 %v186
      %v288 = vunpack.c.l.b16 %v187
      %v289 = vunpack.c.h.b16 %v187
      %v290 = vunpack.c.l.b16 %v188
      %v291 = vunpack.c.h.b16 %v188
      %v292 = vunpack.c.l.b16 %v189
      %v293 = vunpack.c.h.b16 %v189
      %v294 = vunpack.c.l.b16 %v190
      %v295 = vunpack.c.h.b16 %v190
      %v296 = vunpack.c.l.b16 %v191
      %v297 = vunpack.c.h.b16 %v191
      %v298 = vunpack.c.l.b16 %v192
      %v299 = vunpack.c.h.b16 %v192
      %v300 = vunpack.c.l.b16 %v193
      %v301 = vunpack.c.h.b16 %v193
      %v302 = vunpack.c.l.b16 %v194
      %v303 = vunpack.c.h.b16 %v194
      %v304 = vunpack.c.l.b16 %v195
      %v305 = vunpack.c.h.b16 %v195
      %v306 = vunpack.c.l.b16 %v196
      %v307 = vunpack.c.h.b16 %v196
      %v308 = vunpack.c.l.b16 %v197
      %v309 = vunpack.c.h.b16 %v197
      %v310 = vunpack.c.l.b16 %v198
      %v311 = vunpack.c.h.b16 %v198
      %v312 = vunpack.c.l.b16 %v199
      %v313 = vunpack.c.h.b16 %v199
      %v314 = vunpack.c.l.b16 %v200
      %v315 = vunpack.c.h.b16 %v200
      %v316 = vunpack.c.l.b16 %v201
      %v317 = vunpack.c.h.b16 %v201
      %v318 = vunpack.c.l.b16 %v202
      %v319 = vunpack.c.h.b16 %v202
      %v320 = vunpack.c.l.b16 %v203
      %v321 = vunpack.c.h.b16 %v203
      %v322 = vpack.c.b16 %v262, %v258
      %v323 = vpack.c.b16 %v263, %v259
      %v324 = vpack.c.b16 %v264, %v260
      %v325 = vpack.c.b16 %v265, %v261
      %v326 = vpack.c.b16 %v270, %v266
      %v327 = vpack.c.b16 %v271, %v267
      %v328 = vpack.c.b16 %v272, %v268
      %v329 = vpack.c.b16 %v273, %v269
      %v330 = vpack.c.b16 %v278, %v274
      %v331 = vpack.c.b16 %v279, %v275
      %v332 = vpack.c.b16 %v280, %v276
      %v333 = vpack.c.b16 %v281, %v277
      %v334 = vpack.c.b16 %v286, %v282
      %v335 = vpack.c.b16 %v287, %v283
      %v336 = vpack.c.b16 %v288, %v284
      %v337 = vpack.c.b16 %v289, %v285
      %v338 = vpack.c.b16 %v294, %v290
      %v339 = vpack.c.b16 %v295, %v291
      %v340 = vpack.c.b16 %v296, %v292
      %v341 = vpack.c.b16 %v297, %v293
      %v342 = vpack.c.b16 %v302, %v298
      %v343 = vpack.c.b16 %v303, %v299
      %v344 = vpack.c.b16 %v304, %v300
      %v345 = vpack.c.b16 %v305, %v301
      %v346 = vpack.c.b16 %v310, %v306
      %v347 = vpack.c.b16 %v311, %v307
      %v348 = vpack.c.b16 %v312, %v308
      %v349 = vpack.c.b16 %v313, %v309
      %v350 = vpack.c.b16 %v318, %v314
      %v351 = vpack.c.b16 %v319, %v315
      %v352 = vpack.c.b16 %v320, %v316
      %v353 = vpack.c.b16 %v321, %v317
      %386 = vmatprep.subr.bf16.mxu0 %v323
      %387 = vmatpush1.bf16.msra.mxu0 %v322
      %388 = vmatprep.subr.bf16.mxu0 %v327
      %389 = vmatpush1.bf16.msra.mxu0 %v326
      %390 = vmatprep.subr.bf16.mxu0 %v331
      %391 = vmatpush1.bf16.msra.mxu0 %v330
      %392 = vmatprep.subr.bf16.mxu0 %v335
      %393 = vmatpush1.bf16.msra.mxu0 %v334
      %394 = vmatprep.subr.bf16.mxu0 %v339
      %395 = vmatpush1.bf16.msra.mxu0 %v338
      %396 = vmatprep.subr.bf16.mxu0 %v343
      %397 = vmatpush1.bf16.msra.mxu0 %v342
      %398 = vmatprep.subr.bf16.mxu0 %v347
      %399 = vmatpush1.bf16.msra.mxu0 %v346
      %400 = vmatprep.subr.bf16.mxu0 %v351
      %401 = vmatpush1.bf16.msra.mxu0 %v350
      %402 = vmatprep.subr.bf16.mxu0 0
      %403 = vmatpush1.bf16.msra.mxu0 0
      %404 = vmatprep.subr.bf16.mxu0 0
      %405 = vmatpush1.bf16.msra.mxu0 0
      %406 = vmatprep.subr.bf16.mxu0 0
      %407 = vmatpush1.bf16.msra.mxu0 0
      %408 = vmatprep.subr.bf16.mxu0 0
      %409 = vmatpush1.bf16.msra.mxu0 0
      %410 = vmatprep.subr.bf16.mxu0 0
      %411 = vmatpush1.bf16.msra.mxu0 0
      %412 = vmatprep.subr.bf16.mxu0 0
      %413 = vmatpush1.bf16.msra.mxu0 0
      %414 = vmatprep.subr.bf16.mxu0 0
      %415 = vmatpush1.bf16.msra.mxu0 0
      %416 = vmatprep.subr.bf16.mxu0 0
      %417 = vmatpush1.bf16.msra.mxu0 0
      %418 = vmatprep.mubr.bf16.mxu0 0
      %419 = vmatmul.mubr.bf16.gmra.mrb[0].mxu0 %v171
      %v420 = vpop.f32.mrb[0].mxu0
      %v421 = vadd.f32 %v209, %v420
      %v422 = vpop.f32.mrb[0].mxu0
      %v423 = vadd.f32 %v213, %v422
      %v424 = vpop.f32.mrb[0].mxu0
      %v425 = vpop.f32.mrb[0].mxu0
      %426 = vdwg.mxu0
      %427 = vmatprep.subr.bf16.mxu0 %v325
      %428 = vmatpush1.bf16.msra.mxu0 %v324
      %429 = vmatprep.subr.bf16.mxu0 %v329
      %430 = vmatpush1.bf16.msra.mxu0 %v328
      %431 = vmatprep.subr.bf16.mxu0 %v333
      %432 = vmatpush1.bf16.msra.mxu0 %v332
      %433 = vmatprep.subr.bf16.mxu0 %v337
      %434 = vmatpush1.bf16.msra.mxu0 %v336
      %435 = vmatprep.subr.bf16.mxu0 %v341
      %436 = vmatpush1.bf16.msra.mxu0 %v340
      %437 = vmatprep.subr.bf16.mxu0 %v345
      %438 = vmatpush1.bf16.msra.mxu0 %v344
      %439 = vmatprep.subr.bf16.mxu0 %v349
      %440 = vmatpush1.bf16.msra.mxu0 %v348
      %441 = vmatprep.subr.bf16.mxu0 %v353
      %442 = vmatpush1.bf16.msra.mxu0 %v352
      %443 = vmatprep.subr.bf16.mxu0 0
      %444 = vmatpush1.bf16.msra.mxu0 0
      %445 = vmatprep.subr.bf16.mxu0 0
      %446 = vmatpush1.bf16.msra.mxu0 0
      %447 = vmatprep.subr.bf16.mxu0 0
      %448 = vmatpush1.bf16.msra.mxu0 0
      %449 = vmatprep.subr.bf16.mxu0 0
      %450 = vmatpush1.bf16.msra.mxu0 0
      %451 = vmatprep.subr.bf16.mxu0 0
      %452 = vmatpush1.bf16.msra.mxu0 0
      %453 = vmatprep.subr.bf16.mxu0 0
      %454 = vmatpush1.bf16.msra.mxu0 0
      %455 = vmatprep.subr.bf16.mxu0 0
      %456 = vmatpush1.bf16.msra.mxu0 0
      %457 = vmatprep.subr.bf16.mxu0 0
      %458 = vmatpush1.bf16.msra.mxu0 0
      %459 = vmatprep.mubr.bf16.mxu0 0
      %460 = vmatmul.mubr.bf16.gmra.mrb[0].mxu0 %v171
      %v461 = vpop.f32.mrb[0].mxu0
      %v462 = vadd.f32 %v217, %v461
      %v463 = vpop.f32.mrb[0].mxu0
      %v464 = vadd.f32 %v221, %v463
      %v465 = vpop.f32.mrb[0].mxu0
      %v466 = vpop.f32.mrb[0].mxu0
      %467 = vdwg.mxu0
      %v468 = vmax.f32 %v421, 0.0
      %v469 = vmax.f32 %v423, 0.0
      %v470 = vmax.f32 %v462, 0.0
      %v471 = vmax.f32 %v464, 0.0
      %v472 = vpack.c.bf16 %v468, %v468
      %v473 = vpack.c.bf16 %v469, %v469
      %v474 = vpack.c.bf16 %v470, %v470
      %v475 = vpack.c.bf16 %v471, %v471
      %v480 = vunpack.c.l.b16 %v472
      %v481 = vunpack.c.l.b16 %v473
      %v482 = vunpack.c.l.b16 %v474
      %v483 = vunpack.c.l.b16 %v475
      %v484 = vpack.c.b16 %v481, %v480
      %v485 = vpack.c.b16 %v483, %v482
      %488 = vst [vmem:[#allocation2] sm:$0xff] %v484
      %489 = vst [vmem:[#allocation2 + $0x8] sm:$0xff] %v485
    $region49: #{tpu_custom_call.1} parent=1 // pred_fallthru
      _
    %v490 = vld [vmem:[#allocation2] sm:$0xff]
    %v491 = vld [vmem:[#allocation2 + $0x8] sm:$0xff]
    %v492 = vld [vmem:[#allocation9] sm:$0xff]
    %v493 = vld [vmem:[#allocation9 + $0x8] sm:$0xff]
    %v494 = vld [vmem:[#allocation9 + $0x10] sm:$0xff]
    %v495 = vld [vmem:[#allocation9 + $0x18] sm:$0xff]
    %v496 = vld [vmem:[#allocation9 + $0x20] sm:$0xff]
    %v497 = vld [vmem:[#allocation9 + $0x28] sm:$0xff]
    %v498 = vld [vmem:[#allocation9 + $0x30] sm:$0xff]
    %v499 = vld [vmem:[#allocation9 + $0x38] sm:$0xff]
    %v500 = vld [vmem:[#allocation9 + $0x40] sm:$0xff]
    %v501 = vld [vmem:[#allocation9 + $0x48] sm:$0xff]
    %v502 = vld [vmem:[#allocation9 + $0x50] sm:$0xff]
    %v503 = vld [vmem:[#allocation9 + $0x58] sm:$0xff]
    %v504 = vld [vmem:[#allocation9 + $0x60] sm:$0xff]
    %v505 = vld [vmem:[#allocation9 + $0x68] sm:$0xff]
    %v506 = vld [vmem:[#allocation9 + $0x70] sm:$0xff]
    %v507 = vld [vmem:[#allocation9 + $0x78] sm:$0xff]
    %v508 = vld [vmem:[#allocation9 + $0x80] sm:$0xff]
    %v509 = vld [vmem:[#allocation9 + $0x88] sm:$0xff]
    %v510 = vld [vmem:[#allocation9 + $0x90] sm:$0xff]
    %v511 = vld [vmem:[#allocation9 + $0x98] sm:$0xff]
    %v512 = vld [vmem:[#allocation9 + $0xa0] sm:$0xff]
    %v513 = vld [vmem:[#allocation9 + $0xa8] sm:$0xff]
    %v514 = vld [vmem:[#allocation9 + $0xb0] sm:$0xff]
    %v515 = vld [vmem:[#allocation9 + $0xb8] sm:$0xff]
    %v516 = vld [vmem:[#allocation9 + $0xc0] sm:$0xff]
    %v517 = vld [vmem:[#allocation9 + $0xc8] sm:$0xff]
    %v518 = vld [vmem:[#allocation9 + $0xd0] sm:$0xff]
    %v519 = vld [vmem:[#allocation9 + $0xd8] sm:$0xff]
    %v520 = vld [vmem:[#allocation9 + $0xe0] sm:$0xff]
    %v521 = vld [vmem:[#allocation9 + $0xe8] sm:$0xff]
    %v522 = vld [vmem:[#allocation9 + $0xf0] sm:$0xff]
    %v523 = vld [vmem:[#allocation9 + $0xf8] sm:$0xff]
    %v524 = vld [vmem:[#allocation9 + $0x100] sm:$0xff]
    %v525 = vld [vmem:[#allocation9 + $0x108] sm:$0xff]
    %v526 = vld [vmem:[#allocation9 + $0x110] sm:$0xff]
    %v527 = vld [vmem:[#allocation9 + $0x118] sm:$0xff]
    %v528 = vld [vmem:[#allocation9 + $0x120] sm:$0xff]
    %v529 = vld [vmem:[#allocation9 + $0x128] sm:$0xff]
    %v530 = vld [vmem:[#allocation9 + $0x130] sm:$0xff]
    %v531 = vld [vmem:[#allocation9 + $0x138] sm:$0xff]
    %v532 = vld [vmem:[#allocation9 + $0x140] sm:$0xff]
    %v533 = vld [vmem:[#allocation9 + $0x148] sm:$0xff]
    %v534 = vld [vmem:[#allocation9 + $0x150] sm:$0xff]
    %v535 = vld [vmem:[#allocation9 + $0x158] sm:$0xff]
    %v536 = vld [vmem:[#allocation9 + $0x160] sm:$0xff]
    %v537 = vld [vmem:[#allocation9 + $0x168] sm:$0xff]
    %v538 = vld [vmem:[#allocation9 + $0x170] sm:$0xff]
    %v539 = vld [vmem:[#allocation9 + $0x178] sm:$0xff]
    %v540 = vld [vmem:[#allocation9 + $0x180] sm:$0xff]
    %v541 = vld [vmem:[#allocation9 + $0x188] sm:$0xff]
    %v542 = vld [vmem:[#allocation9 + $0x190] sm:$0xff]
    %v543 = vld [vmem:[#allocation9 + $0x198] sm:$0xff]
    %v544 = vld [vmem:[#allocation9 + $0x1a0] sm:$0xff]
    %v545 = vld [vmem:[#allocation9 + $0x1a8] sm:$0xff]
    %v546 = vld [vmem:[#allocation9 + $0x1b0] sm:$0xff]
    %v547 = vld [vmem:[#allocation9 + $0x1b8] sm:$0xff]
    %v548 = vld [vmem:[#allocation9 + $0x1c0] sm:$0xff]
    %v549 = vld [vmem:[#allocation9 + $0x1c8] sm:$0xff]
    %v550 = vld [vmem:[#allocation9 + $0x1d0] sm:$0xff]
    %v551 = vld [vmem:[#allocation9 + $0x1d8] sm:$0xff]
    %v552 = vld [vmem:[#allocation9 + $0x1e0] sm:$0xff]
    %v553 = vld [vmem:[#allocation9 + $0x1e8] sm:$0xff]
    %v554 = vld [vmem:[#allocation9 + $0x1f0] sm:$0xff]
    %v555 = vld [vmem:[#allocation9 + $0x1f8] sm:$0xff]
    %v556 = vld [vmem:[%s6] sm:$0x3]
    %v558 = vlaneseq
    %v559 = vshrl.u32 %v558, 7
    %v560 = vsub.s32 0, %v559
    %v561 = vrot.slane %v556, %v560
    %v562 = vlaneseq
    %v563 = vshrl.u32 %v562, 7
    %v564 = vsub.s32 1, %v563
    %v565 = vrot.slane %v556, %v564
    %v570 = vunpack.c.l.b16 %v490
    %v571 = vunpack.c.h.b16 %v490
    %v572 = vunpack.c.l.b16 %v491
    %v573 = vunpack.c.h.b16 %v491
    %v574 = vpack.c.b16 %v570, %v570
    %v575 = vpack.c.b16 %v571, %v571
    %v576 = vpack.c.b16 %v572, %v572
    %v577 = vpack.c.b16 %v573, %v573
    %v646 = vunpack.c.l.b16 %v492
    %v647 = vunpack.c.h.b16 %v492
    %v648 = vunpack.c.l.b16 %v493
    %v649 = vunpack.c.h.b16 %v493
    %v650 = vunpack.c.l.b16 %v494
    %v651 = vunpack.c.h.b16 %v494
    %v652 = vunpack.c.l.b16 %v495
    %v653 = vunpack.c.h.b16 %v495
    %v654 = vunpack.c.l.b16 %v496
    %v655 = vunpack.c.h.b16 %v496
    %v656 = vunpack.c.l.b16 %v497
    %v657 = vunpack.c.h.b16 %v497
    %v658 = vunpack.c.l.b16 %v498
    %v659 = vunpack.c.h.b16 %v498
    %v660 = vunpack.c.l.b16 %v499
    %v661 = vunpack.c.h.b16 %v499
    %v662 = vunpack.c.l.b16 %v500
    %v663 = vunpack.c.h.b16 %v500
    %v664 = vunpack.c.l.b16 %v501
    %v665 = vunpack.c.h.b16 %v501
    %v666 = vunpack.c.l.b16 %v502
    %v667 = vunpack.c.h.b16 %v502
    %v668 = vunpack.c.l.b16 %v503
    %v669 = vunpack.c.h.b16 %v503
    %v670 = vunpack.c.l.b16 %v504
    %v671 = vunpack.c.h.b16 %v504
    %v672 = vunpack.c.l.b16 %v505
    %v673 = vunpack.c.h.b16 %v505
    %v674 = vunpack.c.l.b16 %v506
    %v675 = vunpack.c.h.b16 %v506
    %v676 = vunpack.c.l.b16 %v507
    %v677 = vunpack.c.h.b16 %v507
    %v678 = vunpack.c.l.b16 %v508
    %v679 = vunpack.c.h.b16 %v508
    %v680 = vunpack.c.l.b16 %v509
    %v681 = vunpack.c.h.b16 %v509
    %v682 = vunpack.c.l.b16 %v510
    %v683 = vunpack.c.h.b16 %v510
    %v684 = vunpack.c.l.b16 %v511
    %v685 = vunpack.c.h.b16 %v511
    %v686 = vunpack.c.l.b16 %v512
    %v687 = vunpack.c.h.b16 %v512
    %v688 = vunpack.c.l.b16 %v513
    %v689 = vunpack.c.h.b16 %v513
    %v690 = vunpack.c.l.b16 %v514
    %v691 = vunpack.c.h.b16 %v514
    %v692 = vunpack.c.l.b16 %v515
    %v693 = vunpack.c.h.b16 %v515
    %v694 = vunpack.c.l.b16 %v516
    %v695 = vunpack.c.h.b16 %v516
    %v696 = vunpack.c.l.b16 %v517
    %v697 = vunpack.c.h.b16 %v517
    %v698 = vunpack.c.l.b16 %v518
    %v699 = vunpack.c.h.b16 %v518
    %v700 = vunpack.c.l.b16 %v519
    %v701 = vunpack.c.h.b16 %v519
    %v702 = vunpack.c.l.b16 %v520
    %v703 = vunpack.c.h.b16 %v520
    %v704 = vunpack.c.l.b16 %v521
    %v705 = vunpack.c.h.b16 %v521
    %v706 = vunpack.c.l.b16 %v522
    %v707 = vunpack.c.h.b16 %v522
    %v708 = vunpack.c.l.b16 %v523
    %v709 = vunpack.c.h.b16 %v523
    %v710 = vunpack.c.l.b16 %v524
    %v711 = vunpack.c.h.b16 %v524
    %v712 = vunpack.c.l.b16 %v525
    %v713 = vunpack.c.h.b16 %v525
    %v714 = vunpack.c.l.b16 %v526
    %v715 = vunpack.c.h.b16 %v526
    %v716 = vunpack.c.l.b16 %v527
    %v717 = vunpack.c.h.b16 %v527
    %v718 = vunpack.c.l.b16 %v528
    %v719 = vunpack.c.h.b16 %v528
    %v720 = vunpack.c.l.b16 %v529
    %v721 = vunpack.c.h.b16 %v529
    %v722 = vunpack.c.l.b16 %v530
    %v723 = vunpack.c.h.b16 %v530
    %v724 = vunpack.c.l.b16 %v531
    %v725 = vunpack.c.h.b16 %v531
    %v726 = vunpack.c.l.b16 %v532
    %v727 = vunpack.c.h.b16 %v532
    %v728 = vunpack.c.l.b16 %v533
    %v729 = vunpack.c.h.b16 %v533
    %v730 = vunpack.c.l.b16 %v534
    %v731 = vunpack.c.h.b16 %v534
    %v732 = vunpack.c.l.b16 %v535
    %v733 = vunpack.c.h.b16 %v535
    %v734 = vunpack.c.l.b16 %v536
    %v735 = vunpack.c.h.b16 %v536
    %v736 = vunpack.c.l.b16 %v537
    %v737 = vunpack.c.h.b16 %v537
    %v738 = vunpack.c.l.b16 %v538
    %v739 = vunpack.c.h.b16 %v538
    %v740 = vunpack.c.l.b16 %v539
    %v741 = vunpack.c.h.b16 %v539
    %v742 = vunpack.c.l.b16 %v540
    %v743 = vunpack.c.h.b16 %v540
    %v744 = vunpack.c.l.b16 %v541
    %v745 = vunpack.c.h.b16 %v541
    %v746 = vunpack.c.l.b16 %v542
    %v747 = vunpack.c.h.b16 %v542
    %v748 = vunpack.c.l.b16 %v543
    %v749 = vunpack.c.h.b16 %v543
    %v750 = vunpack.c.l.b16 %v544
    %v751 = vunpack.c.h.b16 %v544
    %v752 = vunpack.c.l.b16 %v545
    %v753 = vunpack.c.h.b16 %v545
    %v754 = vunpack.c.l.b16 %v546
    %v755 = vunpack.c.h.b16 %v546
    %v756 = vunpack.c.l.b16 %v547
    %v757 = vunpack.c.h.b16 %v547
    %v758 = vunpack.c.l.b16 %v548
    %v759 = vunpack.c.h.b16 %v548
    %v760 = vunpack.c.l.b16 %v549
    %v761 = vunpack.c.h.b16 %v549
    %v762 = vunpack.c.l.b16 %v550
    %v763 = vunpack.c.h.b16 %v550
    %v764 = vunpack.c.l.b16 %v551
    %v765 = vunpack.c.h.b16 %v551
    %v766 = vunpack.c.l.b16 %v552
    %v767 = vunpack.c.h.b16 %v552
    %v768 = vunpack.c.l.b16 %v553
    %v769 = vunpack.c.h.b16 %v553
    %v770 = vunpack.c.l.b16 %v554
    %v771 = vunpack.c.h.b16 %v554
    %v772 = vunpack.c.l.b16 %v555
    %v773 = vunpack.c.h.b16 %v555
    %v774 = vpack.c.b16 %v648, %v646
    %v775 = vpack.c.b16 %v649, %v647
    %v776 = vpack.c.b16 %v652, %v650
    %v777 = vpack.c.b16 %v653, %v651
    %v778 = vpack.c.b16 %v656, %v654
    %v779 = vpack.c.b16 %v657, %v655
    %v780 = vpack.c.b16 %v660, %v658
    %v781 = vpack.c.b16 %v661, %v659
    %v782 = vpack.c.b16 %v664, %v662
    %v783 = vpack.c.b16 %v665, %v663
    %v784 = vpack.c.b16 %v668, %v666
    %v785 = vpack.c.b16 %v669, %v667
    %v786 = vpack.c.b16 %v672, %v670
    %v787 = vpack.c.b16 %v673, %v671
    %v788 = vpack.c.b16 %v676, %v674
    %v789 = vpack.c.b16 %v677, %v675
    %v790 = vpack.c.b16 %v680, %v678
    %v791 = vpack.c.b16 %v681, %v679
    %v792 = vpack.c.b16 %v684, %v682
    %v793 = vpack.c.b16 %v685, %v683
    %v794 = vpack.c.b16 %v688, %v686
    %v795 = vpack.c.b16 %v689, %v687
    %v796 = vpack.c.b16 %v692, %v690
    %v797 = vpack.c.b16 %v693, %v691
    %v798 = vpack.c.b16 %v696, %v694
    %v799 = vpack.c.b16 %v697, %v695
    %v800 = vpack.c.b16 %v700, %v698
    %v801 = vpack.c.b16 %v701, %v699
    %v802 = vpack.c.b16 %v704, %v702
    %v803 = vpack.c.b16 %v705, %v703
    %v804 = vpack.c.b16 %v708, %v706
    %v805 = vpack.c.b16 %v709, %v707
    %v806 = vpack.c.b16 %v712, %v710
    %v807 = vpack.c.b16 %v713, %v711
    %v808 = vpack.c.b16 %v716, %v714
    %v809 = vpack.c.b16 %v717, %v715
    %v810 = vpack.c.b16 %v720, %v718
    %v811 = vpack.c.b16 %v721, %v719
    %v812 = vpack.c.b16 %v724, %v722
    %v813 = vpack.c.b16 %v725, %v723
    %v814 = vpack.c.b16 %v728, %v726
    %v815 = vpack.c.b16 %v729, %v727
    %v816 = vpack.c.b16 %v732, %v730
    %v817 = vpack.c.b16 %v733, %v731
    %v818 = vpack.c.b16 %v736, %v734
    %v819 = vpack.c.b16 %v737, %v735
    %v820 = vpack.c.b16 %v740, %v738
    %v821 = vpack.c.b16 %v741, %v739
    %v822 = vpack.c.b16 %v744, %v742
    %v823 = vpack.c.b16 %v745, %v743
    %v824 = vpack.c.b16 %v748, %v746
    %v825 = vpack.c.b16 %v749, %v747
    %v826 = vpack.c.b16 %v752, %v750
    %v827 = vpack.c.b16 %v753, %v751
    %v828 = vpack.c.b16 %v756, %v754
    %v829 = vpack.c.b16 %v757, %v755
    %v830 = vpack.c.b16 %v760, %v758
    %v831 = vpack.c.b16 %v761, %v759
    %v832 = vpack.c.b16 %v764, %v762
    %v833 = vpack.c.b16 %v765, %v763
    %v834 = vpack.c.b16 %v768, %v766
    %v835 = vpack.c.b16 %v769, %v767
    %v836 = vpack.c.b16 %v772, %v770
    %v837 = vpack.c.b16 %v773, %v771
    %902 = vmatprep.subr.bf16.mxu0 %v775
    %903 = vmatpush1.bf16.msra.mxu0 %v774
    %904 = vmatprep.subr.bf16.mxu0 %v777
    %905 = vmatpush1.bf16.msra.mxu0 %v776
    %906 = vmatprep.subr.bf16.mxu0 %v779
    %907 = vmatpush1.bf16.msra.mxu0 %v778
    %908 = vmatprep.subr.bf16.mxu0 %v781
    %909 = vmatpush1.bf16.msra.mxu0 %v780
    %910 = vmatprep.subr.bf16.mxu0 %v783
    %911 = vmatpush1.bf16.msra.mxu0 %v782
    %912 = vmatprep.subr.bf16.mxu0 %v785
    %913 = vmatpush1.bf16.msra.mxu0 %v784
    %914 = vmatprep.subr.bf16.mxu0 %v787
    %915 = vmatpush1.bf16.msra.mxu0 %v786
    %916 = vmatprep.subr.bf16.mxu0 %v789
    %917 = vmatpush1.bf16.msra.mxu0 %v788
    %918 = vmatprep.subr.bf16.mxu0 %v791
    %919 = vmatpush1.bf16.msra.mxu0 %v790
    %920 = vmatprep.subr.bf16.mxu0 %v793
    %921 = vmatpush1.bf16.msra.mxu0 %v792
    %922 = vmatprep.subr.bf16.mxu0 %v795
    %923 = vmatpush1.bf16.msra.mxu0 %v794
    %924 = vmatprep.subr.bf16.mxu0 %v797
    %925 = vmatpush1.bf16.msra.mxu0 %v796
    %926 = vmatprep.subr.bf16.mxu0 %v799
    %927 = vmatpush1.bf16.msra.mxu0 %v798
    %928 = vmatprep.subr.bf16.mxu0 %v801
    %929 = vmatpush1.bf16.msra.mxu0 %v800
    %930 = vmatprep.subr.bf16.mxu0 %v803
    %931 = vmatpush1.bf16.msra.mxu0 %v802
    %932 = vmatprep.subr.bf16.mxu0 %v805
    %933 = vmatpush1.bf16.msra.mxu0 %v804
    %934 = vmatprep.mubr.bf16.mxu0 %v575
    %935 = vmatmul.mubr.bf16.gmra.mrb[0].mxu0 %v574
    %v936 = vpop.f32.mrb[0].mxu0
    %v937 = vadd.f32 %v561, %v936
    %v938 = vpop.f32.mrb[0].mxu0
    %v939 = vadd.f32 %v565, %v938
    %v940 = vpop.f32.mrb[0].mxu0
    %v941 = vpop.f32.mrb[0].mxu0
    %942 = vdwg.mxu0
    %943 = vmatprep.subr.bf16.mxu0 %v807
    %944 = vmatpush1.bf16.msra.mxu0 %v806
    %945 = vmatprep.subr.bf16.mxu0 %v809
    %946 = vmatpush1.bf16.msra.mxu0 %v808
    %947 = vmatprep.subr.bf16.mxu0 %v811
    %948 = vmatpush1.bf16.msra.mxu0 %v810
    %949 = vmatprep.subr.bf16.mxu0 %v813
    %950 = vmatpush1.bf16.msra.mxu0 %v812
    %951 = vmatprep.subr.bf16.mxu0 %v815
    %952 = vmatpush1.bf16.msra.mxu0 %v814
    %953 = vmatprep.subr.bf16.mxu0 %v817
    %954 = vmatpush1.bf16.msra.mxu0 %v816
    %955 = vmatprep.subr.bf16.mxu0 %v819
    %956 = vmatpush1.bf16.msra.mxu0 %v818
    %957 = vmatprep.subr.bf16.mxu0 %v821
    %958 = vmatpush1.bf16.msra.mxu0 %v820
    %959 = vmatprep.subr.bf16.mxu0 %v823
    %960 = vmatpush1.bf16.msra.mxu0 %v822
    %961 = vmatprep.subr.bf16.mxu0 %v825
    %962 = vmatpush1.bf16.msra.mxu0 %v824
    %963 = vmatprep.subr.bf16.mxu0 %v827
    %964 = vmatpush1.bf16.msra.mxu0 %v826
    %965 = vmatprep.subr.bf16.mxu0 %v829
    %966 = vmatpush1.bf16.msra.mxu0 %v828
    %967 = vmatprep.subr.bf16.mxu0 %v831
    %968 = vmatpush1.bf16.msra.mxu0 %v830
    %969 = vmatprep.subr.bf16.mxu0 %v833
    %970 = vmatpush1.bf16.msra.mxu0 %v832
    %971 = vmatprep.subr.bf16.mxu0 %v835
    %972 = vmatpush1.bf16.msra.mxu0 %v834
    %973 = vmatprep.subr.bf16.mxu0 %v837
    %974 = vmatpush1.bf16.msra.mxu0 %v836
    %975 = vmatprep.mubr.bf16.mxu0 %v577
    %976 = vmatmul.mubr.bf16.gmra.mrb[0].mxu0 %v576
    %v977 = vpop.f32.mrb[0].mxu0
    %v978 = vadd.f32 %v937, %v977
    %v979 = vpop.f32.mrb[0].mxu0
    %v980 = vadd.f32 %v939, %v979
    %v981 = vpop.f32.mrb[0].mxu0
    %v982 = vpop.f32.mrb[0].mxu0
    %983 = vdwg.mxu0
    %984 = vst [vmem:[#allocation11] sm:$0xff] %v978
    %985 = vst [vmem:[#allocation11 + $0x8] sm:$0xff] %v980
    // Predicated region
    $region50: #{tpu_custom_call.1} parent=1 // pred_check
      _
    $region51: #{tpu_custom_call.1} parent=1 // pred_check_branch
      %987 = sbr.rel (0) target = $region53
    $region52: #{tpu_custom_call.1} parent=1 // pred_region
      %s989 = ssub.s32 256, 256
      %990 = vsyncadd [#allocation5], %s989
      %s992 = sshll.u32 [#allocation11], 4
      %s993 = int_to_ptr.vmem [resolvable:$true] %s992
      %995 = dma.vmem_to_hbm [thread:$0]  %s993, 256, %s7, [#allocation5]
    $region53: #{tpu_custom_call.1} parent=1 // pred_fallthru
      _
    // Predicated region
    $region54: #{tpu_custom_call.1} parent=1 // pred_check
      _
    $region55: #{tpu_custom_call.1} parent=1 // pred_check_branch
      %997 = sbr.rel (0) target = $region57
    $region56: #{tpu_custom_call.1} parent=1 // pred_region
      %998 = dma.done [#allocation5], 256
    $region57: #{tpu_custom_call.1} parent=1 // pred_fallthru
      _
    %999 = vsyncpa [#allocation4], 1
    %1000 = vsyncpa [#allocation7], 1
    %1001 = vsyncpa [#allocation10], 1
    %1002 = vsyncpa [#allocation5], 1

</llo_original>
